<compile_context>
chip_gen: v5e
topology: v5e:2x2
jax: 0.10.0
libtpu: 0.0.40
codegen_flags: <defaults>
</compile_context>

<pallas_src>
import math
import functools

import jax
import jax.numpy as jnp
from jax.experimental import pallas as pl
from jax.experimental.pallas import tpu as pltpu


def _token_embedding_kernel(tok_ref, emb_ref, out_ref, *, scale):
    # tok_ref: (TB, 1) int32 in VMEM  (token ids for this block, column vector)
    # emb_ref: (V, D)  in VMEM        (full embedding table, grid-constant)
    # out_ref: (TB, D)                (scaled embedding rows for this block)
    tb = tok_ref.shape[0]
    vocab = emb_ref.shape[0]

    toks = tok_ref[...]                                            # (TB, 1)
    vocab_ids = jax.lax.broadcasted_iota(jnp.int32, (tb, vocab), 1)
    # One-hot over the vocab axis; out-of-range ids -> all-zero row (no OOB).
    onehot = (vocab_ids == toks).astype(emb_ref.dtype)             # (TB, V)

    # Gather as an MXU matmul: (TB, V) @ (V, D) -> (TB, D), f32 accumulate.
    gathered = jnp.dot(onehot, emb_ref[...],
                       preferred_element_type=jnp.float32)
    out_ref[...] = (gathered * jnp.float32(scale)).astype(out_ref.dtype)


def _round_down(x: int, m: int) -> int:
    return (x // m) * m


def _vmem_budget_bytes() -> int:
    """Generation-aware VMEM budget (~80% of physical capacity)."""
    try:
        cap = int(pltpu.get_tpu_info().vmem_capacity_bytes)
    except Exception:
        cap = 64 * 1024 * 1024          # conservative (v7x-sized) fallback
    return (cap * 4) // 5


def _choose_tb(n: int, vocab: int, d: int, itemsize: int,
               budget: int, requested: int) -> int:
    """Pick the token-block size (rows per grid step)."""
    # Per-row VMEM cost assuming a single-buffered table:
    #   token column (lane-padded) x2 buffers, out tile x2 buffers,
    #   one-hot temp (f32), f32 matmul result.
    per_row = (2 * 128 * 4
               + 2 * d * itemsize
               + max(vocab, 128) * 4
               + d * 4)
    table_bytes = vocab * d * itemsize
    avail = budget - table_bytes
    tb_cap = max(avail // per_row, 8) if avail > 0 else 8

    tb = min(requested, tb_cap)

    if n <= tb:
        if n >= 512:
            # Keep >= 2 grid steps so v7x can shard across its 2 TensorCores.
            return max(_round_down(n // 2, 256), 256)
        # Whole problem fits in one tile: full-array block, no padding needed.
        return n

    if n >= 512:
        tb = min(tb, max(_round_down(n // 2, 256), 256))

    # Feed the MXU M-dim: multiples of 256 (fall back to 8-row sublane align).
    if tb >= 256:
        tb = _round_down(tb, 256)
    else:
        tb = max(_round_down(tb, 8), 8)
    return tb


def token_embedding(tokens: jax.Array, emb_table: jax.Array, *, tb: int = 2048):
    """tokens: (B, S) int; emb_table: (V, D) -> (B, S, D) in table dtype."""
    B, S = tokens.shape
    V, D = emb_table.shape
    N = B * S
    scale = math.sqrt(D)
    itemsize = jnp.dtype(emb_table.dtype).itemsize

    budget = _vmem_budget_bytes()
    tb = _choose_tb(N, V, D, itemsize, budget, tb)
    grid = (N + tb - 1) // tb
    n_padded = grid * tb

    tok_col = tokens.reshape(N, 1).astype(jnp.int32)
    if n_padded != N:
        # Pad token ids only (cheap int32); the output keeps shape (N, D) and
        # Pallas masks the write-back of the final partial block, so the
        # embedding rows are written to HBM exactly once (no [:N] re-copy).
        tok_col = jnp.concatenate(
            [tok_col, jnp.zeros((n_padded - N, 1), jnp.int32)], axis=0)

    # Scoped-VMEM limit: only raise above the conservative default when the
    # estimated footprint needs it, capped by the generation-aware budget.
    est_bytes = (V * D * itemsize                 # table (single-buffered)
                 + 2 * tb * 128 * 4               # token column blocks
                 + 2 * tb * D * itemsize          # output tiles
                 + tb * max(V, 128) * 4           # one-hot temporary
                 + tb * D * 4)                    # f32 matmul result
    est_bytes = int(est_bytes * 3 // 2)           # headroom
    vmem_limit = min(est_bytes, budget) if est_bytes > 16 * 1024 * 1024 else None

    def run(table_spec):
        return pl.pallas_call(
            functools.partial(_token_embedding_kernel, scale=scale),
            out_shape=jax.ShapeDtypeStruct((N, D), emb_table.dtype),
            grid=(grid,),
            in_specs=[
                pl.BlockSpec((tb, 1), lambda i: (i, 0)),   # token ids (VMEM)
                table_spec,                                # full table
            ],
            out_specs=pl.BlockSpec((tb, D), lambda i: (i, 0)),
            compiler_params=pltpu.CompilerParams(
                dimension_semantics=("parallel",),
                vmem_limit_bytes=vmem_limit,
            ),
        )(tok_col, emb_table)

    try:
        # Grid-constant table: single pipeline buffer (no re-fetch, half VMEM).
        out_flat = run(pl.BlockSpec((V, D), lambda i: (0, 0),
                                    pipeline_mode=pl.Buffered(1)))
    except Exception:
        # Fallback for jax versions that reject single-buffered blocks.
        out_flat = run(pl.BlockSpec((V, D), lambda i: (0, 0)))

    return out_flat.reshape(B, S, D)


if __name__ == "__main__":
    # Module hyper-parameters (synthetic, deterministic init).
    vocab_size = 64
    emb_size = 128

    key = jax.random.PRNGKey(0)
    k_emb, k_tok1, k_tok2, k_tok3 = jax.random.split(key, 4)

    # nn.Embedding default init: N(0, 1).
    emb_table = jax.random.normal(k_emb, (vocab_size, emb_size), jnp.float32)

    def reference(toks):
        return jnp.take(emb_table, toks, axis=0) * math.sqrt(emb_size)

    # Case 1: (2, 8) tokens — single full-array block.
    tokens1 = jax.random.randint(k_tok1, (2, 8), 0, vocab_size, jnp.int32)
    out1 = jax.block_until_ready(token_embedding(tokens1, emb_table))
    assert out1.shape == (2, 8, emb_size)
    assert out1.dtype == jnp.float32
    assert jnp.allclose(out1, reference(tokens1), atol=1e-5, rtol=1e-5)

    # Case 2: (3, 5) tokens — odd token count, still a single block.
    tokens2 = jax.random.randint(k_tok2, (3, 5), 0, vocab_size, jnp.int32)
    out2 = jax.block_until_ready(token_embedding(tokens2, emb_table))
    assert out2.shape == (3, 5, emb_size)
    assert jnp.allclose(out2, reference(tokens2), atol=1e-5, rtol=1e-5)

    # Case 3: (4, 300) tokens — multi-step grid with a masked partial tail.
    tokens3 = jax.random.randint(k_tok3, (4, 300), 0, vocab_size, jnp.int32)
    out3 = jax.block_until_ready(token_embedding(tokens3, emb_table))
    assert out3.shape == (4, 300, emb_size)
    assert jnp.allclose(out3, reference(tokens3), atol=1e-5, rtol=1e-5)

    print("KERNEL_OK")
</pallas_src>

<mosaic_0001>
module attributes {stable_mosaic.version = 11 : i64} {
  func.func @_token_embedding_kernel(%arg0: i32, %arg1: memref<16x1xi32, #tpu.memory_space<vmem>>, %arg2: memref<64x128xf32, #tpu.memory_space<vmem>>, %arg3: memref<16x128xf32, #tpu.memory_space<vmem>>) attributes {dimension_semantics = [#tpu.dimension_semantics<parallel>], iteration_bounds = array<i64: 1>, scalar_prefetch = 0 : i64, scratch_operands = 0 : i64, tpu.core_type = #tpu.core_type<tc>, window_params = [{transform_indices = @transform_0, window_bounds = array<i64: 16, 1>}, {pipeline_mode = #tpu.pipeline_mode<synchronous>, transform_indices = @transform_1, window_bounds = array<i64: 64, 128>}, {transform_indices = @transform_2, window_bounds = array<i64: 16, 128>}]} {
    %c0 = arith.constant 0 : index
    %c0_0 = arith.constant 0 : index
    %0 = vector.load %arg1[%c0, %c0_0] : memref<16x1xi32, #tpu.memory_space<vmem>>, vector<16x1xi32>
    %1 = tpu.iota {dimensions = array<i32: 1>} : vector<16x64xi32>
    %2 = vector.broadcast %0 : vector<16x1xi32> to vector<16x64xi32>
    %3 = arith.cmpi eq, %1, %2 : vector<16x64xi32>
    %4 = arith.extui %3 : vector<16x64xi1> to vector<16x64xi32>
    %5 = arith.sitofp %4 : vector<16x64xi32> to vector<16x64xf32>
    %c0_1 = arith.constant 0 : index
    %c0_2 = arith.constant 0 : index
    %6 = vector.load %arg2[%c0_1, %c0_2] : memref<64x128xf32, #tpu.memory_space<vmem>>, vector<64x128xf32>
    %cst = arith.constant dense<0.000000e+00> : vector<16x128xf32>
    %7 = tpu.matmul %5, %6, %cst {dimension_numbers = #tpu.dot_dimension_numbers<[1], [0], [0], [1], [0, 0, 1, 1], [], []>} : vector<16x64xf32>, vector<64x128xf32>, vector<16x128xf32> -> vector<16x128xf32>
    %cst_3 = arith.constant 11.3137083 : f32
    %8 = vector.broadcast %cst_3 : f32 to vector<16x128xf32>
    %9 = arith.mulf %7, %8 : vector<16x128xf32>
    %c0_4 = arith.constant 0 : index
    %c0_5 = arith.constant 0 : index
    %10 = vector.load %arg3[%c0_4, %c0_5] : memref<16x128xf32, #tpu.memory_space<vmem>>, vector<16x128xf32>
    tpu.vector_store %arg3[%c0_4, %c0_5], %9 {strides = array<i32>} : memref<16x128xf32, #tpu.memory_space<vmem>>, vector<16x128xf32>,
    return
  }
  func.func @transform_0(%arg0: i32) -> (i32, i32) {
    %c0_i32 = arith.constant 0 : i32
    %c0_i32_0 = arith.constant 0 : i32
    return %arg0, %c0_i32 : i32, i32
  }
  func.func @transform_1(%arg0: i32) -> (i32, i32) {
    %c0_i32 = arith.constant 0 : i32
    %c0_i32_0 = arith.constant 0 : i32
    %c0_i32_1 = arith.constant 0 : i32
    return %c0_i32, %c0_i32_0 : i32, i32
  }
  func.func @transform_2(%arg0: i32) -> (i32, i32) {
    %c0_i32 = arith.constant 0 : i32
    %c0_i32_0 = arith.constant 0 : i32
    return %arg0, %c0_i32 : i32, i32
  }
}

module attributes {stable_mosaic.version = 11 : i64} {
  func.func @_token_embedding_kernel(%arg0: i32, %arg1: memref<16x1xi32, #tpu.memory_space<vmem>>, %arg2: memref<64x128xf32, #tpu.memory_space<vmem>>, %arg3: memref<16x128xf32, #tpu.memory_space<vmem>>) attributes {dimension_semantics = [#tpu.dimension_semantics<parallel>], iteration_bounds = array<i64: 1>, scalar_prefetch = 0 : i64, scratch_operands = 0 : i64, tpu.core_type = #tpu.core_type<tc>, window_params = [{transform_indices = @transform_0, window_bounds = array<i64: 16, 1>}, {pipeline_mode = #tpu.pipeline_mode<synchronous>, transform_indices = @transform_1, window_bounds = array<i64: 64, 128>}, {transform_indices = @transform_2, window_bounds = array<i64: 16, 128>}]} {
    %c0 = arith.constant 0 : index
    %c0_0 = arith.constant 0 : index
    %0 = vector.load %arg1[%c0, %c0_0] : memref<16x1xi32, #tpu.memory_space<vmem>>, vector<16x1xi32>
    %1 = tpu.iota {dimensions = array<i32: 1>} : vector<16x64xi32>
    %2 = vector.broadcast %0 : vector<16x1xi32> to vector<16x64xi32>
    %3 = arith.cmpi eq, %1, %2 : vector<16x64xi32>
    %4 = arith.extui %3 : vector<16x64xi1> to vector<16x64xi32>
    %5 = arith.sitofp %4 : vector<16x64xi32> to vector<16x64xf32>
    %c0_1 = arith.constant 0 : index
    %c0_2 = arith.constant 0 : index
    %6 = vector.load %arg2[%c0_1, %c0_2] : memref<64x128xf32, #tpu.memory_space<vmem>>, vector<64x128xf32>
    %cst = arith.constant dense<0.000000e+00> : vector<16x128xf32>
    %7 = tpu.matmul %5, %6, %cst {dimension_numbers = #tpu.dot_dimension_numbers<[1], [0], [0], [1], [0, 0, 1, 1], [], []>} : vector<16x64xf32>, vector<64x128xf32>, vector<16x128xf32> -> vector<16x128xf32>
    %cst_3 = arith.constant 11.3137083 : f32
    %8 = vector.broadcast %cst_3 : f32 to vector<16x128xf32>
    %9 = arith.mulf %7, %8 : vector<16x128xf32>
    %c0_4 = arith.constant 0 : index
    %c0_5 = arith.constant 0 : index
    %10 = vector.load %arg3[%c0_4, %c0_5] : memref<16x128xf32, #tpu.memory_space<vmem>>, vector<16x128xf32>
    tpu.vector_store %arg3[%c0_4, %c0_5], %9 {strides = array<i32>} : memref<16x128xf32, #tpu.memory_space<vmem>>, vector<16x128xf32>,
    return
  }
  func.func @transform_0(%arg0: i32) -> (i32, i32) {
    %c0_i32 = arith.constant 0 : i32
    %c0_i32_0 = arith.constant 0 : i32
    return %arg0, %c0_i32 : i32, i32
  }
  func.func @transform_1(%arg0: i32) -> (i32, i32) {
    %c0_i32 = arith.constant 0 : i32
    %c0_i32_0 = arith.constant 0 : i32
    %c0_i32_1 = arith.constant 0 : i32
    return %c0_i32, %c0_i32_0 : i32, i32
  }
  func.func @transform_2(%arg0: i32) -> (i32, i32) {
    %c0_i32 = arith.constant 0 : i32
    %c0_i32_0 = arith.constant 0 : i32
    return %arg0, %c0_i32 : i32, i32
  }
}

</mosaic_0001>

<llo_original>
// kernel: tpu_custom_call.1
$region0: #{tpu_custom_call.1}
  #allocation0 [shape = 'u32[]', space=smem, size = 0x4, offset = 0x4, fixed_abs, tag = 'smem constant byte address 0x4 - core index']
  #allocation1 [shape = 'u32[72,128]{1,0:T(1,128)}', space=vmem, size = 0x9000, scoped, tag = 'internal scratch']
  %s0 = inlined_call_operand.vmem [shape: s32[16,1], index: 0, kind: input, shape index: {}]
  %s1 = inlined_call_operand.hbm [shape: f32[64,128], index: 1, kind: input, shape index: {}]
  %s2 = inlined_call_operand.hbm [shape: f32[16,128], index: 2, kind: output, shape index: {}]
  %s3 = sld [smem:[#allocation0]]
  $region22: #{tpu_custom_call.1} parent=0
    _
  %s5 = ssub.s32 1, %s3
  %s6 = scalar_select 0, %s5, %s3
  $region1: #{tpu_custom_call.1} parent=0
    #allocation2 [shape = 'u8[32768]{0}', space=vmem, size = 0x8000, scoped, tag = 'input window, operand 1, single buffered']
    #allocation3 [shape = 's32[1]{0}', space=sflag, size = 0x4, scoped, tag = 'scoped memory for tpu_custom_call.1']
    #allocation4 [shape = 's32[1]{0}', space=sflag, size = 0x4, scoped, tag = 'scoped memory for tpu_custom_call.1']
    #allocation5 [shape = 'u8[8192]{0}', space=vmem, size = 0x2000, scoped, tag = 'output window, operand 0, single buffered']
    %7 = vsyncpa [#allocation3], 0
    %8 = vsyncpa [#allocation4], 0
    // Predicated region
    $region2: #{tpu_custom_call.1} parent=1 // pred_check
      _
    $region3: #{tpu_custom_call.1} parent=1 // pred_check_branch
      %10 = sbr.rel (0) target = $region5
    $region4: #{tpu_custom_call.1} parent=1 // pred_region
      _
    $region5: #{tpu_custom_call.1} parent=1 // pred_fallthru
      _
    // Predicated region
    $region6: #{tpu_custom_call.1} parent=1 // pred_check
      _
    $region7: #{tpu_custom_call.1} parent=1 // pred_check_branch
      %12 = sbr.rel (0) target = $region9
    $region8: #{tpu_custom_call.1} parent=1 // pred_region
      %14 = vsyncadd [#allocation3], 0
      %s15 = sshll.u32 %s1, 4
      %s16 = int_to_ptr.hbm [resolvable:$true] %s15
      %s17 = sshll.u32 [#allocation2], 4
      %s18 = int_to_ptr.vmem [resolvable:$true] %s17
      %23 = dma.hbm_to_vmem [thread:$0]  %s16, 1024, %s18, [#allocation3], 128, 128, 8
    $region9: #{tpu_custom_call.1} parent=1 // pred_fallthru
      _
    // Predicated region
    $region10: #{tpu_custom_call.1} parent=1 // pred_check
      _
    $region11: #{tpu_custom_call.1} parent=1 // pred_check_branch
      %25 = sbr.rel (0) target = $region13
    $region12: #{tpu_custom_call.1} parent=1 // pred_region
      %27 = dma.done [#allocation3], 1024
    $region13: #{tpu_custom_call.1} parent=1 // pred_fallthru
      _
    %v28 = vld [vmem:[%s0] sm:$0xff]
    %v29 = vld [vmem:[%s0 + $0x8] sm:$0xff]
    %v30 = vlaneseq
    %v31 = vand.u32 %v30, 127
    %32 = vset.pattern.permute.xlu0 0
    %33 = vperm.xlu0 %32, %v28
    %v34 = vpop.permute.xlu0 %33
    %35 = vset.pattern.permute.xlu0 0
    %36 = vperm.xlu0 %35, %v29
    %v37 = vpop.permute.xlu0 %36
    %vm38 = vcmp.eq.s32.totalorder %v31, %v34
    %vm39 = vcmp.eq.s32.totalorder %v31, %v37
    %v40 = vsel %vm38, 1, 0
    %v41 = vsel %vm39, 1, 0
    %v42 = vcvt.s32.f32 %v40
    %v43 = vcvt.s32.f32 %v41
    %v44 = vld [vmem:[#allocation2] sm:$0xff]
    %v45 = vld [vmem:[#allocation2 + $0x8] sm:$0xff]
    %v46 = vld [vmem:[#allocation2 + $0x10] sm:$0xff]
    %v47 = vld [vmem:[#allocation2 + $0x18] sm:$0xff]
    %v48 = vld [vmem:[#allocation2 + $0x20] sm:$0xff]
    %v49 = vld [vmem:[#allocation2 + $0x28] sm:$0xff]
    %v50 = vld [vmem:[#allocation2 + $0x30] sm:$0xff]
    %v51 = vld [vmem:[#allocation2 + $0x38] sm:$0xff]
    %vm52 = vcmask 523264
    %v54 = vsel %vm52, %v42, 0
    %v57 = vsel %vm52, %v43, 0
    %59 = vmatpush.msra.mxu0 0.0
    %60 = vmatpush.msra.mxu0 0.0
    %61 = vmatpush.msra.mxu0 0.0
    %62 = vmatpush.msra.mxu0 0.0
    %63 = vmatpush.msra.mxu0 0.0
    %64 = vmatpush.msra.mxu0 0.0
    %65 = vmatpush.msra.mxu0 0.0
    %66 = vmatpush.msra.mxu0 0.0
    %67 = vmatpush.msra.mxu0 %v51
    %68 = vmatpush.msra.mxu0 %v50
    %69 = vmatpush.msra.mxu0 %v49
    %70 = vmatpush.msra.mxu0 %v48
    %71 = vmatpush.msra.mxu0 %v47
    %72 = vmatpush.msra.mxu0 %v46
    %73 = vmatpush.msra.mxu0 %v45
    %74 = vmatpush.msra.mxu0 %v44
    %75 = vmatmul.f32.gmra.mxu0 %v54
    %v76 = vpop.f32.mrf.mxu0
    %v77 = vadd.f32 0.0, %v76
    %78 = vmatmul.f32.gmra.mxu0 %v57
    %v79 = vpop.f32.mrf.mxu0
    %v80 = vadd.f32 0.0, %v79
    %81 = vdwg.mxu0
    %v82 = vmul.f32 %v77, 11.313708
    %v83 = vmul.f32 %v80, 11.313708
    %84 = vst [vmem:[#allocation5] sm:$0xff] %v82
    %85 = vst [vmem:[#allocation5 + $0x8] sm:$0xff] %v83
    // Predicated region
    $region14: #{tpu_custom_call.1} parent=1 // pred_check
      _
    $region15: #{tpu_custom_call.1} parent=1 // pred_check_branch
      %87 = sbr.rel (0) target = $region17
    $region16: #{tpu_custom_call.1} parent=1 // pred_region
      %89 = vsyncadd [#allocation4], 0
      %s90 = sshll.u32 [#allocation5], 4
      %s91 = int_to_ptr.vmem [resolvable:$true] %s90
      %s92 = sshll.u32 %s2, 4
      %s93 = int_to_ptr.hbm [resolvable:$true] %s92
      %98 = dma.vmem_to_hbm [thread:$0]  %s91, 256, %s93, [#allocation4], 128, 128, 8
    $region17: #{tpu_custom_call.1} parent=1 // pred_fallthru
      _
    // Predicated region
    $region18: #{tpu_custom_call.1} parent=1 // pred_check
      _
    $region19: #{tpu_custom_call.1} parent=1 // pred_check_branch
      %100 = sbr.rel (0) target = $region21
    $region20: #{tpu_custom_call.1} parent=1 // pred_region
      %102 = dma.done [#allocation4], 256
    $region21: #{tpu_custom_call.1} parent=1 // pred_fallthru
      _
    %103 = vsyncpa [#allocation3], 1
    %104 = vsyncpa [#allocation4], 1

// kernel: tpu_custom_call.1
$region0: #{tpu_custom_call.1}
  #allocation0 [shape = 'u32[]', space=smem, size = 0x4, offset = 0x4, fixed_abs, tag = 'smem constant byte address 0x4 - core index']
  #allocation1 [shape = 'u32[72,128]{1,0:T(1,128)}', space=vmem, size = 0x9000, scoped, tag = 'internal scratch']
  %s0 = inlined_call_operand.vmem [shape: s32[16,1], index: 0, kind: input, shape index: {}]
  %s1 = inlined_call_operand.hbm [shape: f32[64,128], index: 1, kind: input, shape index: {}]
  %s2 = inlined_call_operand.hbm [shape: f32[16,128], index: 2, kind: output, shape index: {}]
  %s3 = sld [smem:[#allocation0]]
  $region22: #{tpu_custom_call.1} parent=0
    _
  %s5 = ssub.s32 1, %s3
  %s6 = scalar_select 0, %s5, %s3
  $region1: #{tpu_custom_call.1} parent=0
    #allocation2 [shape = 'u8[32768]{0}', space=vmem, size = 0x8000, scoped, tag = 'input window, operand 1, single buffered']
    #allocation3 [shape = 's32[1]{0}', space=sflag, size = 0x4, scoped, tag = 'scoped memory for tpu_custom_call.1']
    #allocation4 [shape = 's32[1]{0}', space=sflag, size = 0x4, scoped, tag = 'scoped memory for tpu_custom_call.1']
    #allocation5 [shape = 'u8[8192]{0}', space=vmem, size = 0x2000, scoped, tag = 'output window, operand 0, single buffered']
    %7 = vsyncpa [#allocation3], 0
    %8 = vsyncpa [#allocation4], 0
    // Predicated region
    $region2: #{tpu_custom_call.1} parent=1 // pred_check
      _
    $region3: #{tpu_custom_call.1} parent=1 // pred_check_branch
      %10 = sbr.rel (0) target = $region5
    $region4: #{tpu_custom_call.1} parent=1 // pred_region
      _
    $region5: #{tpu_custom_call.1} parent=1 // pred_fallthru
      _
    // Predicated region
    $region6: #{tpu_custom_call.1} parent=1 // pred_check
      _
    $region7: #{tpu_custom_call.1} parent=1 // pred_check_branch
      %12 = sbr.rel (0) target = $region9
    $region8: #{tpu_custom_call.1} parent=1 // pred_region
      %14 = vsyncadd [#allocation3], 0
      %s15 = sshll.u32 %s1, 4
      %s16 = int_to_ptr.hbm [resolvable:$true] %s15
      %s17 = sshll.u32 [#allocation2], 4
      %s18 = int_to_ptr.vmem [resolvable:$true] %s17
      %23 = dma.hbm_to_vmem [thread:$0]  %s16, 1024, %s18, [#allocation3], 128, 128, 8
    $region9: #{tpu_custom_call.1} parent=1 // pred_fallthru
      _
    // Predicated region
    $region10: #{tpu_custom_call.1} parent=1 // pred_check
      _
    $region11: #{tpu_custom_call.1} parent=1 // pred_check_branch
      %25 = sbr.rel (0) target = $region13
    $region12: #{tpu_custom_call.1} parent=1 // pred_region
      %27 = dma.done [#allocation3], 1024
    $region13: #{tpu_custom_call.1} parent=1 // pred_fallthru
      _
    %v28 = vld [vmem:[%s0] sm:$0xff]
    %v29 = vld [vmem:[%s0 + $0x8] sm:$0xff]
    %v30 = vlaneseq
    %v31 = vand.u32 %v30, 127
    %32 = vset.pattern.permute.xlu0 0
    %33 = vperm.xlu0 %32, %v28
    %v34 = vpop.permute.xlu0 %33
    %35 = vset.pattern.permute.xlu0 0
    %36 = vperm.xlu0 %35, %v29
    %v37 = vpop.permute.xlu0 %36
    %vm38 = vcmp.eq.s32.totalorder %v31, %v34
    %vm39 = vcmp.eq.s32.totalorder %v31, %v37
    %v40 = vsel %vm38, 1, 0
    %v41 = vsel %vm39, 1, 0
    %v42 = vcvt.s32.f32 %v40
    %v43 = vcvt.s32.f32 %v41
    %v44 = vld [vmem:[#allocation2] sm:$0xff]
    %v45 = vld [vmem:[#allocation2 + $0x8] sm:$0xff]
    %v46 = vld [vmem:[#allocation2 + $0x10] sm:$0xff]
    %v47 = vld [vmem:[#allocation2 + $0x18] sm:$0xff]
    %v48 = vld [vmem:[#allocation2 + $0x20] sm:$0xff]
    %v49 = vld [vmem:[#allocation2 + $0x28] sm:$0xff]
    %v50 = vld [vmem:[#allocation2 + $0x30] sm:$0xff]
    %v51 = vld [vmem:[#allocation2 + $0x38] sm:$0xff]
    %vm52 = vcmask 523264
    %v54 = vsel %vm52, %v42, 0
    %v57 = vsel %vm52, %v43, 0
    %59 = vmatpush.msra.mxu0 0.0
    %60 = vmatpush.msra.mxu0 0.0
    %61 = vmatpush.msra.mxu0 0.0
    %62 = vmatpush.msra.mxu0 0.0
    %63 = vmatpush.msra.mxu0 0.0
    %64 = vmatpush.msra.mxu0 0.0
    %65 = vmatpush.msra.mxu0 0.0
    %66 = vmatpush.msra.mxu0 0.0
    %67 = vmatpush.msra.mxu0 %v51
    %68 = vmatpush.msra.mxu0 %v50
    %69 = vmatpush.msra.mxu0 %v49
    %70 = vmatpush.msra.mxu0 %v48
    %71 = vmatpush.msra.mxu0 %v47
    %72 = vmatpush.msra.mxu0 %v46
    %73 = vmatpush.msra.mxu0 %v45
    %74 = vmatpush.msra.mxu0 %v44
    %75 = vmatmul.f32.gmra.mxu0 %v54
    %v76 = vpop.f32.mrf.mxu0
    %v77 = vadd.f32 0.0, %v76
    %78 = vmatmul.f32.gmra.mxu0 %v57
    %v79 = vpop.f32.mrf.mxu0
    %v80 = vadd.f32 0.0, %v79
    %81 = vdwg.mxu0
    %v82 = vmul.f32 %v77, 11.313708
    %v83 = vmul.f32 %v80, 11.313708
    %84 = vst [vmem:[#allocation5] sm:$0xff] %v82
    %85 = vst [vmem:[#allocation5 + $0x8] sm:$0xff] %v83
    // Predicated region
    $region14: #{tpu_custom_call.1} parent=1 // pred_check
      _
    $region15: #{tpu_custom_call.1} parent=1 // pred_check_branch
      %87 = sbr.rel (0) target = $region17
    $region16: #{tpu_custom_call.1} parent=1 // pred_region
      %89 = vsyncadd [#allocation4], 0
      %s90 = sshll.u32 [#allocation5], 4
      %s91 = int_to_ptr.vmem [resolvable:$true] %s90
      %s92 = sshll.u32 %s2, 4
      %s93 = int_to_ptr.hbm [resolvable:$true] %s92
      %98 = dma.vmem_to_hbm [thread:$0]  %s91, 256, %s93, [#allocation4], 128, 128, 8
    $region17: #{tpu_custom_call.1} parent=1 // pred_fallthru
      _
    // Predicated region
    $region18: #{tpu_custom_call.1} parent=1 // pred_check
      _
    $region19: #{tpu_custom_call.1} parent=1 // pred_check_branch
      %100 = sbr.rel (0) target = $region21
    $region20: #{tpu_custom_call.1} parent=1 // pred_region
      %102 = dma.done [#allocation4], 256
    $region21: #{tpu_custom_call.1} parent=1 // pred_fallthru
      _
    %103 = vsyncpa [#allocation3], 1
    %104 = vsyncpa [#allocation4], 1

</llo_original>
